<compile_context>
chip_gen: v5e
topology: v5e:2x2
jax: 0.10.0
libtpu: 0.0.40
codegen_flags: <defaults>
</compile_context>

<pallas_src>
import functools

import jax
import jax.numpy as jnp
from jax.experimental import pallas as pl
from jax.experimental.pallas import tpu as pltpu


def _causal_conv_kernel(*args, kernel_size, dilation, pad, tile_l, halo_w,
                        has_halo):
    """One (batch, L-tile) grid step.

    refs (in order):
      x_ref    : (1, C_in, TL)        current length tile of x
      halo_ref : (1, C_in, halo_w)    [tiled path only] lane-aligned block of x
                                      ending exactly at this tile's start
      w_ref    : (C_out, K*C_in)      tap-flattened weights
      b_ref    : (C_out, 1)           bias (f32)
      o_ref    : (1, C_out, TL)       output tile
      xwin_ref : (C_in, halo_w+TL)    scratch: [left halo | current tile]
      xstk_ref : (K*C_in, TL)         scratch: stacked dilated taps
    """
    if has_halo:
        x_ref, halo_ref, w_ref, b_ref, o_ref, xwin_ref, xstk_ref = args
    else:
        x_ref, w_ref, b_ref, o_ref, xwin_ref, xstk_ref = args

    c_in = x_ref.shape[1]
    cur = x_ref[0]                                     # (C_in, TL)

    # Left part of the window: previous columns of x, or zeros for the first
    # tile (this IS the causal left pad -- no HBM pad copy needed).
    if has_halo:
        l = pl.program_id(1)

        @pl.when(l == 0)
        def _():
            xwin_ref[:, 0:halo_w] = jnp.zeros((c_in, halo_w), cur.dtype)

        @pl.when(l > 0)
        def _():
            xwin_ref[:, 0:halo_w] = halo_ref[0]
    else:
        xwin_ref[:, 0:halo_w] = jnp.zeros((c_in, halo_w), cur.dtype)

    xwin_ref[:, halo_w:halo_w + tile_l] = cur          # lane-aligned store

    # Stack the K dilated taps along the channel axis so the whole conv is a
    # single dense MXU contraction instead of K tiny ones.
    for t in range(kernel_size):
        lead = pad - t * dilation                      # static >= 0
        tap = xwin_ref[:, pl.ds(halo_w - lead, tile_l)]
        xstk_ref[t * c_in:(t + 1) * c_in, :] = tap

    acc = jnp.dot(w_ref[...], xstk_ref[...],
                  preferred_element_type=jnp.float32)  # (C_out, TL), f32 acc
    acc = acc + b_ref[...]                             # f32 bias add
    o_ref[0] = acc.astype(o_ref.dtype)


def _pick_tile(L, C_in, C_out, K, halo_w, tile_l_max):
    """Largest lane-dense tile dividing L whose per-step footprint fits VMEM."""
    if L % 128 != 0:
        return None
    budget = 24 * 1024 * 1024        # leave headroom under the 32 MiB limit
    for cand in (2048, 1024, 512, 256, 128):
        if cand > max(tile_l_max, 128):
            continue
        if cand % halo_w != 0 or L % cand != 0:
            continue
        per_step = 4 * (2 * C_in * cand            # x tile (double-buffered)
                        + 2 * C_in * halo_w        # halo  (double-buffered)
                        + 2 * C_out * cand         # output (double-buffered)
                        + C_in * (halo_w + cand)   # window scratch
                        + K * C_in * cand          # stacked-tap scratch
                        + C_out * K * C_in + C_out)
        if per_step <= budget:
            return cand
    return None


def causal_conv(x, weight, bias, *, kernel_size, subsampl, tile_l=1024):
    """x: (B, C_in, L)  weight: (C_out, C_in, K)  bias: (C_out,) -> (B, C_out, L).

    Equivalent to CausalConv(mode='dilation', requested_output='same')(x).
    """
    B, C_in, L = x.shape
    C_out = weight.shape[0]
    K, D = kernel_size, subsampl
    pad = (K - 1) * D

    # Glue: tap-flattened weights, w2[o, t*C_in + c] = weight[o, c, t]; f32 bias.
    w2 = jnp.transpose(weight, (0, 2, 1)).reshape(C_out, K * C_in)
    b2 = bias.astype(jnp.float32).reshape(C_out, 1)

    # Halo block width: smallest multiple of 128 covering the causal pad.
    halo_w = max(128, -(-pad // 128) * 128)

    tl = _pick_tile(L, C_in, C_out, K, halo_w, tile_l)
    use_tiled = tl is not None and (L // tl) >= 2

    if use_tiled:
        n_l = L // tl
        bph = tl // halo_w                  # halo-width blocks per length tile
        has_halo = pad > 0
        in_specs = [pl.BlockSpec((1, C_in, tl), lambda b, l: (b, 0, l))]
        operands = [x]
        if has_halo:
            # Overlapping lane-aligned block of x ending at this tile's start
            # (clamped to block 0 for the first tile; zero-masked in-kernel).
            in_specs.append(pl.BlockSpec(
                (1, C_in, halo_w),
                lambda b, l: (b, 0, jnp.maximum(l * bph - 1, 0))))
            operands.append(x)
        in_specs += [
            pl.BlockSpec((C_out, K * C_in), lambda b, l: (0, 0)),
            pl.BlockSpec((C_out, 1), lambda b, l: (0, 0)),
        ]
        operands += [w2, b2]
        out_spec = pl.BlockSpec((1, C_out, tl), lambda b, l: (b, 0, l))
        grid = (B, n_l)
        dims = ("parallel", "parallel")
    else:
        tl = L
        has_halo = False
        in_specs = [
            pl.BlockSpec((1, C_in, L), lambda b: (b, 0, 0)),
            pl.BlockSpec((C_out, K * C_in), lambda b: (0, 0)),
            pl.BlockSpec((C_out, 1), lambda b: (0, 0)),
        ]
        operands = [x, w2, b2]
        out_spec = pl.BlockSpec((1, C_out, L), lambda b: (b, 0, 0))
        grid = (B,)
        dims = ("parallel",)

    kernel = functools.partial(
        _causal_conv_kernel, kernel_size=K, dilation=D, pad=pad, tile_l=tl,
        halo_w=halo_w, has_halo=has_halo)

    return pl.pallas_call(
        kernel,
        out_shape=jax.ShapeDtypeStruct((B, C_out, L), x.dtype),
        grid_spec=pltpu.PrefetchScalarGridSpec(
            num_scalar_prefetch=0,
            grid=grid,
            in_specs=in_specs,
            out_specs=out_spec,
            scratch_shapes=[
                pltpu.VMEM((C_in, halo_w + tl), x.dtype),
                pltpu.VMEM((K * C_in, tl), x.dtype),
            ]),
        compiler_params=pltpu.CompilerParams(
            dimension_semantics=dims,
            vmem_limit_bytes=32 * 1024 * 1024),
    )(*operands)


def _reference(x, weight, bias, *, kernel_size, subsampl):
    pad = (kernel_size - 1) * subsampl
    x_pad = jnp.pad(x, ((0, 0), (0, 0), (pad, 0)))
    y = jax.lax.conv_general_dilated(
        x_pad, weight, window_strides=(1,), padding="VALID",
        rhs_dilation=(subsampl,),
        dimension_numbers=("NCH", "OIH", "NCH"))
    return y + bias.reshape(1, -1, 1)


if __name__ == "__main__":
    key = jax.random.PRNGKey(0)
    kx, kw, kb, kx2, kx3, kw3, kb3 = jax.random.split(key, 7)

    # Shapes consistent with the module: batch=2, in_channels=4,
    # out_channels=8, kernel_size=3, subsampl(dilation)=2.
    B, C_in, C_out, K, D, L = 2, 4, 8, 3, 2, 16
    x = jax.random.normal(kx, (B, C_in, L), dtype=jnp.float32)
    weight = jax.random.normal(kw, (C_out, C_in, K), dtype=jnp.float32) * 0.1
    bias = jax.random.normal(kb, (C_out,), dtype=jnp.float32) * 0.1

    # Case 1: tiny sequence (L=16) -> single full-length tile path.
    out = causal_conv(x, weight, bias, kernel_size=K, subsampl=D)
    out = jax.block_until_ready(out)
    ref = _reference(x, weight, bias, kernel_size=K, subsampl=D)
    assert out.shape == (B, C_out, L), out.shape
    assert jnp.allclose(out, ref, atol=1e-5, rtol=1e-5), \
        float(jnp.max(jnp.abs(out - ref)))

    # Case 2: L=256 with tile_l=128 -> exercises the L-tiled halo path
    # (first tile zero-filled halo, second tile real halo from x).
    L2 = 256
    x2 = jax.random.normal(kx2, (B, C_in, L2), dtype=jnp.float32)
    out2 = causal_conv(x2, weight, bias, kernel_size=K, subsampl=D, tile_l=128)
    out2 = jax.block_until_ready(out2)
    ref2 = _reference(x2, weight, bias, kernel_size=K, subsampl=D)
    assert out2.shape == (B, C_out, L2), out2.shape
    assert jnp.allclose(out2, ref2, atol=1e-5, rtol=1e-5), \
        float(jnp.max(jnp.abs(out2 - ref2)))

    # Case 3: large dilation (pad > 128 -> 256-wide halo block), L=1024.
    K3, D3, L3 = 3, 70, 1024
    x3 = jax.random.normal(kx3, (B, C_in, L3), dtype=jnp.float32)
    w3 = jax.random.normal(kw3, (C_out, C_in, K3), dtype=jnp.float32) * 0.1
    b3 = jax.random.normal(kb3, (C_out,), dtype=jnp.float32) * 0.1
    out3 = causal_conv(x3, w3, b3, kernel_size=K3, subsampl=D3, tile_l=256)
    out3 = jax.block_until_ready(out3)
    ref3 = _reference(x3, w3, b3, kernel_size=K3, subsampl=D3)
    assert out3.shape == (B, C_out, L3), out3.shape
    assert jnp.allclose(out3, ref3, atol=1e-5, rtol=1e-5), \
        float(jnp.max(jnp.abs(out3 - ref3)))

    print("KERNEL_OK")
</pallas_src>

<mosaic_0001>
module attributes {stable_mosaic.version = 11 : i64} {
  func.func @_causal_conv_kernel(%arg0: i32, %arg1: memref<1x4x16xf32, #tpu.memory_space<vmem>>, %arg2: memref<8x12xf32, #tpu.memory_space<vmem>>, %arg3: memref<8x1xf32, #tpu.memory_space<vmem>>, %arg4: memref<1x8x16xf32, #tpu.memory_space<vmem>>, %arg5: memref<4x144xf32, #tpu.memory_space<vmem>>, %arg6: memref<12x16xf32, #tpu.memory_space<vmem>>) attributes {dimension_semantics = [#tpu.dimension_semantics<parallel>], iteration_bounds = array<i64: 2>, scalar_prefetch = 0 : i64, scratch_operands = 2 : i64, tpu.core_type = #tpu.core_type<tc>, window_params = [{transform_indices = @transform_0, window_bounds = array<i64: 1, 4, 16>}, {pipeline_mode = #tpu.pipeline_mode<synchronous>, transform_indices = @transform_1, window_bounds = array<i64: 8, 12>}, {pipeline_mode = #tpu.pipeline_mode<synchronous>, transform_indices = @transform_2, window_bounds = array<i64: 8, 1>}, {transform_indices = @transform_3, window_bounds = array<i64: 1, 8, 16>}]} {
    %c0 = arith.constant 0 : index
    %c0_0 = arith.constant 0 : index
    %c0_1 = arith.constant 0 : index
    %0 = vector.load %arg1[%c0, %c0_0, %c0_1] : memref<1x4x16xf32, #tpu.memory_space<vmem>>, vector<1x4x16xf32>
    %1 = vector.shape_cast %0 : vector<1x4x16xf32> to vector<4x16xf32>
    %cst = arith.constant 0.000000e+00 : f32
    %2 = vector.broadcast %cst : f32 to vector<4x128xf32>
    %c0_2 = arith.constant 0 : index
    %c0_3 = arith.constant 0 : index
    %3 = vector.load %arg5[%c0_2, %c0_3] : memref<4x144xf32, #tpu.memory_space<vmem>>, vector<4x128xf32>
    tpu.vector_store %arg5[%c0_2, %c0_3], %2 {strides = array<i32>} : memref<4x144xf32, #tpu.memory_space<vmem>>, vector<4x128xf32>,
    %c0_4 = arith.constant 0 : index
    %c128 = arith.constant 128 : index
    %4 = vector.load %arg5[%c0_4, %c128] : memref<4x144xf32, #tpu.memory_space<vmem>>, vector<4x16xf32>
    tpu.vector_store %arg5[%c0_4, %c128], %1 {strides = array<i32>} : memref<4x144xf32, #tpu.memory_space<vmem>>, vector<4x16xf32>,
    %c0_5 = arith.constant 0 : index
    %c124 = arith.constant 124 : index
    %5 = vector.load %arg5[%c0_5, %c124] : memref<4x144xf32, #tpu.memory_space<vmem>>, vector<4x16xf32>
    %c0_6 = arith.constant 0 : index
    %c0_7 = arith.constant 0 : index
    %6 = vector.load %arg6[%c0_6, %c0_7] : memref<12x16xf32, #tpu.memory_space<vmem>>, vector<4x16xf32>
    tpu.vector_store %arg6[%c0_6, %c0_7], %5 {strides = array<i32>} : memref<12x16xf32, #tpu.memory_space<vmem>>, vector<4x16xf32>,
    %c0_8 = arith.constant 0 : index
    %c126 = arith.constant 126 : index
    %7 = vector.load %arg5[%c0_8, %c126] : memref<4x144xf32, #tpu.memory_space<vmem>>, vector<4x16xf32>
    %c4 = arith.constant 4 : index
    %c0_9 = arith.constant 0 : index
    %8 = vector.load %arg6[%c4, %c0_9] : memref<12x16xf32, #tpu.memory_space<vmem>>, vector<4x16xf32>
    tpu.vector_store %arg6[%c4, %c0_9], %7 {strides = array<i32>} : memref<12x16xf32, #tpu.memory_space<vmem>>, vector<4x16xf32>,
    %c0_10 = arith.constant 0 : index
    %c128_11 = arith.constant 128 : index
    %9 = vector.load %arg5[%c0_10, %c128_11] : memref<4x144xf32, #tpu.memory_space<vmem>>, vector<4x16xf32>
    %c8 = arith.constant 8 : index
    %c0_12 = arith.constant 0 : index
    %10 = vector.load %arg6[%c8, %c0_12] : memref<12x16xf32, #tpu.memory_space<vmem>>, vector<4x16xf32>
    tpu.vector_store %arg6[%c8, %c0_12], %9 {strides = array<i32>} : memref<12x16xf32, #tpu.memory_space<vmem>>, vector<4x16xf32>,
    %c0_13 = arith.constant 0 : index
    %c0_14 = arith.constant 0 : index
    %11 = vector.load %arg2[%c0_13, %c0_14] : memref<8x12xf32, #tpu.memory_space<vmem>>, vector<8x12xf32>
    %c0_15 = arith.constant 0 : index
    %c0_16 = arith.constant 0 : index
    %12 = vector.load %arg6[%c0_15, %c0_16] : memref<12x16xf32, #tpu.memory_space<vmem>>, vector<12x16xf32>
    %cst_17 = arith.constant dense<0.000000e+00> : vector<8x16xf32>
    %13 = tpu.matmul %11, %12, %cst_17 {dimension_numbers = #tpu.dot_dimension_numbers<[1], [0], [0], [1], [0, 0, 1, 1], [], []>} : vector<8x12xf32>, vector<12x16xf32>, vector<8x16xf32> -> vector<8x16xf32>
    %c0_18 = arith.constant 0 : index
    %c0_19 = arith.constant 0 : index
    %14 = vector.load %arg3[%c0_18, %c0_19] : memref<8x1xf32, #tpu.memory_space<vmem>>, vector<8x1xf32>
    %15 = vector.broadcast %14 : vector<8x1xf32> to vector<8x16xf32>
    %16 = arith.addf %13, %15 : vector<8x16xf32>
    %c0_20 = arith.constant 0 : index
    %c0_21 = arith.constant 0 : index
    %c0_22 = arith.constant 0 : index
    %17 = vector.load %arg4[%c0_20, %c0_21, %c0_22] : memref<1x8x16xf32, #tpu.memory_space<vmem>>, vector<1x8x16xf32>
    %18 = vector.shape_cast %17 : vector<1x8x16xf32> to vector<8x16xf32>
    %19 = vector.shape_cast %16 : vector<8x16xf32> to vector<1x8x16xf32>
    tpu.vector_store %arg4[%c0_20, %c0_21, %c0_22], %19 {strides = array<i32>} : memref<1x8x16xf32, #tpu.memory_space<vmem>>, vector<1x8x16xf32>,
    return
  }
  func.func @transform_0(%arg0: i32) -> (i32, i32, i32) {
    %c0_i32 = arith.constant 0 : i32
    %c0_i32_0 = arith.constant 0 : i32
    %c0_i32_1 = arith.constant 0 : i32
    return %arg0, %c0_i32, %c0_i32_0 : i32, i32, i32
  }
  func.func @transform_1(%arg0: i32) -> (i32, i32) {
    %c0_i32 = arith.constant 0 : i32
    %c0_i32_0 = arith.constant 0 : i32
    %c0_i32_1 = arith.constant 0 : i32
    return %c0_i32, %c0_i32_0 : i32, i32
  }
  func.func @transform_2(%arg0: i32) -> (i32, i32) {
    %c0_i32 = arith.constant 0 : i32
    %c0_i32_0 = arith.constant 0 : i32
    %c0_i32_1 = arith.constant 0 : i32
    return %c0_i32, %c0_i32_0 : i32, i32
  }
  func.func @transform_3(%arg0: i32) -> (i32, i32, i32) {
    %c0_i32 = arith.constant 0 : i32
    %c0_i32_0 = arith.constant 0 : i32
    %c0_i32_1 = arith.constant 0 : i32
    return %arg0, %c0_i32, %c0_i32_0 : i32, i32, i32
  }
}

</mosaic_0001>

<llo_original>
// kernel: tpu_custom_call.1
$region0: #{tpu_custom_call.1}
  #allocation0 [shape = 'u32[]', space=smem, size = 0x4, offset = 0x4, fixed_abs, tag = 'smem constant byte address 0x4 - core index']
  #allocation1 [shape = 'u32[72,128]{1,0:T(1,128)}', space=vmem, size = 0x9000, scoped, tag = 'internal scratch']
  #allocation2 [shape = 'f32[4,144]{1,0:T(4,128)}', space=vmem, size = 0x1000, scoped, tag = 'scratch operand']
  #allocation3 [shape = 'f32[12,16]{1,0:T(8,128)}', space=vmem, size = 0x2000, scoped, tag = 'scratch operand']
  %s0 = inlined_call_operand.vmem [shape: f32[2,4,16], index: 0, kind: input, shape index: {}]
  %s1 = inlined_call_operand.hbm [shape: f32[8,12], index: 1, kind: input, shape index: {}]
  %s2 = inlined_call_operand.vmem [shape: f32[8,1], index: 2, kind: input, shape index: {}]
  %s3 = inlined_call_operand.hbm [shape: f32[2,8,16], index: 3, kind: output, shape index: {}]
  %s4 = sld [smem:[#allocation0]]
  $region49: #{tpu_custom_call.1} parent=0
    _
  %s6 = ssub.s32 1, %s4
  %s7 = scalar_select 0, %s6, %s4
  $region1: #{tpu_custom_call.1} parent=0
    #allocation4 [shape = 'u8[4096]{0}', space=vmem, size = 0x1000, scoped, tag = 'input window, operand 1, single buffered']
    #allocation5 [shape = 's32[2]{0}', space=sflag, size = 0x8, scoped, tag = 'scoped memory for tpu_custom_call.1']
    #allocation6 [shape = 's32[2]{0}', space=sflag, size = 0x8, scoped, tag = 'scoped memory for tpu_custom_call.1']
    #allocation7 [shape = 'u8[8192]{0}', space=vmem, size = 0x2000, scoped, tag = 'output window, operand 0']
    %8 = vsyncpa [#allocation5], 0
    %9 = vsyncpa [#allocation6], 0
    %s10 = scalar_lea.sflag [#allocation6], 1
    %11 = vsyncpa %s10, 0
    loop: start=0, step=1, limit=4
    $region2: #{tpu_custom_call.1} parent=1 // loop_pre_header
      _
    $region3: #{tpu_custom_call.1} parent=1 // loop_header
      %s13 = sphi 0, %s17
      %p14 = scmp.ge.s32.totalorder %s13, 4
      %s23 = sphi 0, %s25
      %s26 = sphi 0, %s23
      %s27 = sphi 0, %s26
      %s43 = sphi 0, %s27
      %s47 = sphi 0, %s47
      %s49 = sphi 0, %s47
      %s50 = sphi 0, %s49
      %s64 = sphi 0, %s50
      %s68 = sphi 0, %s68
      %s70 = sphi 0, %s68
      %s71 = sphi 0, %s70
      %s85 = sphi 0, %s71
      %s91 = sphi 0, %s93
      %s94 = sphi 0, %s91
      %s95 = sphi 0, %s94
      %s111 = sphi 0, %s95
    $region4: #{tpu_custom_call.1} parent=1 // loop_header_branch
      %16 = sbr.rel (%p14) target = $region8
    $region5: #{tpu_custom_call.1} parent=1 // loop_body
      %s18 = ssub.s32 %s13, 1
      %s19 = ssub.s32 %s13, 2
      %s20 = sadd.s32 %s13, 1
      %s21 = ssub.s32 %s13, %s20
      %p22 = scmp.eq.s32.totalorder %s21, 0
      %s24 = sadd.s32 %s23, 1
      %s25 = scalar_select %p22, %s23, %s24
      %p28 = pneg %p22
      %p29 = scmp.eq.s32.totalorder %s13, 1
      %p30 = por %p28, %p29
      %p31 = scmp.ne.s32.totalorder %s23, %s26
      %p32 = scmp.eq.s32.totalorder %s13, 0
      %p33 = por %p31, %p32
      %p34 = scmp.ne.s32.totalorder %s23, %s26
      %p35 = scmp.eq.s32.totalorder %s18, 1
      %p36 = por %p34, %p35
      %p37 = scmp.ne.s32.totalorder %s26, %s27
      %p38 = scmp.eq.s32.totalorder %s18, 0
      %p39 = por %p37, %p38
      %p40 = scmp.ne.s32.totalorder %s26, %s27
      %p41 = scmp.eq.s32.totalorder %s19, 1
      %p42 = por %p40, %p41
      %p44 = scmp.ne.s32.totalorder %s27, %s43
      %p45 = scmp.eq.s32.totalorder %s19, 0
      %p46 = por %p44, %p45
      %s48 = sadd.s32 %s47, 1
      %p51 = scmp.eq.s32.totalorder %s13, 1
      %p52 = scmp.ne.s32.totalorder %s47, %s49
      %p53 = scmp.eq.s32.totalorder %s13, 0
      %p54 = por %p52, %p53
      %p55 = scmp.ne.s32.totalorder %s47, %s49
      %p56 = scmp.eq.s32.totalorder %s18, 1
      %p57 = por %p55, %p56
      %p58 = scmp.ne.s32.totalorder %s49, %s50
      %p59 = scmp.eq.s32.totalorder %s18, 0
      %p60 = por %p58, %p59
      %p61 = scmp.ne.s32.totalorder %s49, %s50
      %p62 = scmp.eq.s32.totalorder %s19, 1
      %p63 = por %p61, %p62
      %p65 = scmp.ne.s32.totalorder %s50, %s64
      %p66 = scmp.eq.s32.totalorder %s19, 0
      %p67 = por %p65, %p66
      %s69 = sadd.s32 %s68, 1
      %p72 = scmp.eq.s32.totalorder %s13, 1
      %p73 = scmp.ne.s32.totalorder %s68, %s70
      %p74 = scmp.eq.s32.totalorder %s13, 0
      %p75 = por %p73, %p74
      %p76 = scmp.ne.s32.totalorder %s68, %s70
      %p77 = scmp.eq.s32.totalorder %s18, 1
      %p78 = por %p76, %p77
      %p79 = scmp.ne.s32.totalorder %s70, %s71
      %p80 = scmp.eq.s32.totalorder %s18, 0
      %p81 = por %p79, %p80
      %p82 = scmp.ne.s32.totalorder %s70, %s71
      %p83 = scmp.eq.s32.totalorder %s19, 1
      %p84 = por %p82, %p83
      %p86 = scmp.ne.s32.totalorder %s71, %s85
      %p87 = scmp.eq.s32.totalorder %s19, 0
      %p88 = por %p86, %p87
      %s89 = ssub.s32 %s13, %s20
      %p90 = scmp.eq.s32.totalorder %s89, 0
      %s92 = sadd.s32 %s91, 1
      %s93 = scalar_select %p90, %s91, %s92
      %p96 = pneg %p90
      %p97 = scmp.eq.s32.totalorder %s13, 1
      %p98 = por %p96, %p97
      %p99 = scmp.ne.s32.totalorder %s91, %s94
      %p100 = scmp.eq.s32.totalorder %s13, 0
      %p101 = por %p99, %p100
      %p102 = scmp.ne.s32.totalorder %s91, %s94
      %p103 = scmp.eq.s32.totalorder %s18, 1
      %p104 = por %p102, %p103
      %p105 = scmp.ne.s32.totalorder %s94, %s95
      %p106 = scmp.eq.s32.totalorder %s18, 0
      %p107 = por %p105, %p106
      %p108 = scmp.ne.s32.totalorder %s94, %s95
      %p109 = scmp.eq.s32.totalorder %s19, 1
      %p110 = por %p108, %p109
      %p112 = scmp.ne.s32.totalorder %s95, %s111
      %p113 = scmp.eq.s32.totalorder %s19, 0
      %p114 = por %p112, %p113
      %p115 = scmp.le.s32.totalorder 1, %s13
      %p116 = scmp.lt.s32.totalorder %s13, 3
      %p117 = pnand %p115, %p116
      %p118 = pneg %p117
      // Predicated region
      $region9: #{tpu_custom_call.1} parent=5 // pred_check
        _
      $region10: #{tpu_custom_call.1} parent=5 // pred_check_branch
        %120 = sbr.rel (%p117) target = $region12
      $region11: #{tpu_custom_call.1} parent=5 // pred_region
        %s121 = ssub.s32 %s13, 1
        // Predicated region
        $region13: #{tpu_custom_call.1} parent=11 // pred_check
          %p122 = pneg %p60
        $region14: #{tpu_custom_call.1} parent=11 // pred_check_branch
          %124 = sbr.rel (%p122) target = $region16
        $region15: #{tpu_custom_call.1} parent=11 // pred_region
          %126 = vsyncadd [#allocation5], 0
          %s128 = sshll.u32 %s1, 4
          %s129 = int_to_ptr.hbm [resolvable:$true] %s128
          %s130 = sshll.u32 [#allocation4], 4
          %s131 = int_to_ptr.vmem [resolvable:$true] %s130
          %133 = dma.hbm_to_vmem [thread:$0]  %s129, 128, %s131, [#allocation5]
        $region16: #{tpu_custom_call.1} parent=11 // pred_fallthru
          _
        // Predicated region
        $region17: #{tpu_custom_call.1} parent=11 // pred_check
          %p134 = pneg %p81
        $region18: #{tpu_custom_call.1} parent=11 // pred_check_branch
          %136 = sbr.rel (%p134) target = $region20
        $region19: #{tpu_custom_call.1} parent=11 // pred_region
          _
        $region20: #{tpu_custom_call.1} parent=11 // pred_fallthru
          _
      $region12: #{tpu_custom_call.1} parent=5 // pred_fallthru
        _
      %p137 = scmp.lt.s32.totalorder %s13, 2
      // Predicated region
      $region21: #{tpu_custom_call.1} parent=5 // pred_check
        %p138 = pneg %p137
      $region22: #{tpu_custom_call.1} parent=5 // pred_check_branch
        %140 = sbr.rel (%p138) target = $region24
      $region23: #{tpu_custom_call.1} parent=5 // pred_region
        // Predicated region
        $region25: #{tpu_custom_call.1} parent=23 // pred_check
          %p141 = pneg %p33
        $region26: #{tpu_custom_call.1} parent=23 // pred_check_branch
          %143 = sbr.rel (%p141) target = $region28
        $region27: #{tpu_custom_call.1} parent=23 // pred_region
          %p144 = scmp.lt.s32.totalorder %s13, 1
          %s145 = scalar_select %p144, %s13, 1
          %s146 = smul.addr %s145, 4
          %s147 = scalar_lea.vmem %s0, %s146
        $region28: #{tpu_custom_call.1} parent=23 // pred_fallthru
          _
      $region24: #{tpu_custom_call.1} parent=5 // pred_fallthru
        _
      %p148 = scmp.le.s32.totalorder 1, %s13
      %p149 = scmp.lt.s32.totalorder %s13, 3
      %p150 = pnand %p148, %p149
      %p151 = pneg %p150
      // Predicated region
      $region29: #{tpu_custom_call.1} parent=5 // pred_check
        _
      $region30: #{tpu_custom_call.1} parent=5 // pred_check_branch
        %153 = sbr.rel (%p150) target = $region32
      $region31: #{tpu_custom_call.1} parent=5 // pred_region
        %s154 = ssub.s32 %s13, 1
        // Predicated region
        $region33: #{tpu_custom_call.1} parent=31 // pred_check
          %p155 = pneg %p60
        $region34: #{tpu_custom_call.1} parent=31 // pred_check_branch
          %157 = sbr.rel (%p155) target = $region36
        $region35: #{tpu_custom_call.1} parent=31 // pred_region
          %159 = dma.done [#allocation5], 128
        $region36: #{tpu_custom_call.1} parent=31 // pred_fallthru
          _
        %p160 = scmp.lt.s32.totalorder %s18, 1
        %s161 = scalar_select %p160, %s18, 1
        %s162 = smul.addr %s161, 4
        %s163 = scalar_lea.vmem %s0, %s162
        %p164 = pneg %p39
        %p165 = pneg %p36
        %p166 = pneg %p60
        %p167 = pneg %p57
        %p168 = pneg %p81
        %p169 = pneg %p78
        %p170 = pneg %p107
        %p171 = pneg %p104
        %s172 = sand.u32 %s94, 1
        %s173 = scalar_lea.sflag [#allocation6], %s172
        %s174 = sand.u32 %s94, 1
        %s175 = smul.addr %s174, 8
        %s176 = scalar_lea.vmem [#allocation7], %s175
        %p177 = scmp.lt.s32.totalorder %s18, 1
        %s178 = scalar_select %p177, %s18, 1
        %s179 = smul.addr %s178, 4
        %s180 = scalar_lea.vmem %s0, %s179
        %v181 = vld [vmem:[%s180] sm:$0xf]
        %182 = vst [vmem:[#allocation2] sm:$0xf] 0.0
        %vm183 = vcmask 125952
        %184 = vst.msk [vmem:[#allocation2 + $0x4] sm:$0xf] %vm183, %v181
        %v185 = vld [vmem:[#allocation2] sm:$0xff]
        %187 = vst [vmem:[#allocation1] ss:$2 sm:$0xff] %v185
        %v188 = vld.sshfl [vmem:[#allocation1] sm:$0xff pattern:$0x75316420]
        %v189 = vld.sshfl [vmem:[#allocation1 + $0x8] sm:$0xff pattern:$0x75316420]
        %190 = vrot.lane.b32.xlu0 %v188, 4
        %v191 = vpop.permute.xlu0 %190
        %192 = vrot.lane.b32.xlu0 %v189, 4
        %v193 = vpop.permute.xlu0 %192
        %vm194 = vcmask 31744
        %v195 = vsel %vm194, %v191, %v193
        %197 = vst.msk [vmem:[#allocation3] sm:$0xf] %vm183, %v195
        %v198 = vld [vmem:[#allocation2] sm:$0xff]
        %200 = vst [vmem:[#allocation1] ss:$2 sm:$0xff] %v198
        %v201 = vld.sshfl [vmem:[#allocation1] sm:$0xff pattern:$0x75316420]
        %v202 = vld.sshfl [vmem:[#allocation1 + $0x8] sm:$0xff pattern:$0x75316420]
        %203 = vrot.lane.b32.xlu0 %v201, 2
        %v204 = vpop.permute.xlu0 %203
        %205 = vrot.lane.b32.xlu0 %v202, 2
        %v206 = vpop.permute.xlu0 %205
        %vm207 = vcmask 15360
        %v208 = vsel %vm207, %v204, %v206
        %210 = vst.msk [vmem:[#allocation3 + $0x4] sm:$0xf] %vm183, %v208
        %v211 = vld [vmem:[#allocation2 + $0x4] sm:$0xf]
        %212 = vst.msk [vmem:[#allocation3 + $0x8] sm:$0xf] %vm183, %v211
        %v213 = vld [vmem:[#allocation4] sm:$0xff]
        %v214 = vld [vmem:[#allocation3] sm:$0xff]
        %v215 = vld [vmem:[#allocation3 + $0x8] sm:$0xf]
        %v216 = vld [vmem:[%s2] sm:$0xff]
        %218 = vset.pattern.permute.xlu0 0
        %219 = vperm.xlu0 %218, %v216
        %v220 = vpop.permute.xlu0 %219
        %vm222 = vcmask 97280
        %v224 = vsel %vm222, %v213, 0
        %vm226 = vcmask 1043456
        %v228 = vsel %vm226, %v215, 0
        %230 = vmatpush.msra.mxu0 0.0
        %231 = vmatpush.msra.mxu0 0.0
        %232 = vmatpush.msra.mxu0 0.0
        %233 = vmatpush.msra.mxu0 0.0
        %234 = vmatpush.msra.mxu0 0.0
        %235 = vmatpush.msra.mxu0 0.0
        %236 = vmatpush.msra.mxu0 0.0
        %237 = vmatpush.msra.mxu0 0.0
        %238 = vmatpush.msra.mxu0 0.0
        %239 = vmatpush.msra.mxu0 0.0
        %240 = vmatpush.msra.mxu0 0.0
        %241 = vmatpush.msra.mxu0 0.0
        %242 = vmatpush.msra.mxu0 0.0
        %243 = vmatpush.msra.mxu0 0.0
        %244 = vmatpush.msra.mxu0 %v228
        %245 = vmatpush.msra.mxu0 %v214
        %246 = vmatmul.f32.gmra.mxu0 %v224
        %v247 = vpop.f32.mrf.mxu0
        %v248 = vadd.f32 %v220, %v247
        %249 = vdwg.mxu0
        %vm250 = vcmask 130048
        %251 = vst.msk [vmem:[%s176] sm:$0xff] %vm250, %v248
        %s252 = sand.u32 %s94, 1
        %s253 = scalar_lea.sflag [#allocation6], %s252
        %s254 = sand.u32 %s94, 1
        %s255 = smul.addr %s254, 8
        %s256 = scalar_lea.vmem [#allocation7], %s255
        // Predicated region
        $region37: #{tpu_custom_call.1} parent=31 // pred_check
          %p257 = pneg %p104
        $region38: #{tpu_custom_call.1} parent=31 // pred_check_branch
          %259 = sbr.rel (%p257) target = $region40
        $region39: #{tpu_custom_call.1} parent=31 // pred_region
          %261 = vsyncadd %s253, 0
          %s262 = smul.addr %s18, 8
          %s263 = scalar_lea.hbm %s3, %s262
          %s265 = sshll.u32 %s256, 4
          %s266 = int_to_ptr.vmem [resolvable:$true] %s265
          %s267 = sshll.u32 %s263, 4
          %s268 = int_to_ptr.hbm [resolvable:$true] %s267
          %270 = dma.vmem_to_hbm [thread:$0]  %s266, 128, %s268, %s253
        $region40: #{tpu_custom_call.1} parent=31 // pred_fallthru
          _
      $region32: #{tpu_custom_call.1} parent=5 // pred_fallthru
        _
      %p271 = scmp.le.s32.totalorder 2, %s13
      // Predicated region
      $region41: #{tpu_custom_call.1} parent=5 // pred_check
        %p272 = pneg %p271
      $region42: #{tpu_custom_call.1} parent=5 // pred_check_branch
        %274 = sbr.rel (%p272) target = $region44
      $region43: #{tpu_custom_call.1} parent=5 // pred_region
        %s275 = ssub.s32 %s13, 2
        // Predicated region
        $region45: #{tpu_custom_call.1} parent=43 // pred_check
          %p276 = pneg %p110
        $region46: #{tpu_custom_call.1} parent=43 // pred_check_branch
          %278 = sbr.rel (%p276) target = $region48
        $region47: #{tpu_custom_call.1} parent=43 // pred_region
          %s279 = sand.u32 %s95, 1
          %s280 = scalar_lea.sflag [#allocation6], %s279
          %s281 = sand.u32 %s95, 1
          %s282 = smul.addr %s281, 8
          %s283 = scalar_lea.vmem [#allocation7], %s282
          %285 = dma.done %s280, 128
        $region48: #{tpu_custom_call.1} parent=43 // pred_fallthru
          _
      $region44: #{tpu_custom_call.1} parent=5 // pred_fallthru
        _
    $region6: #{tpu_custom_call.1} parent=1 // loop_footer
      %s17 = sadd.s32 1, %s13
    $region7: #{tpu_custom_call.1} parent=1 // loop_footer_branch
      %12 = sbr.rel target = $region3
    $region8: #{tpu_custom_call.1} parent=1 // loop_exit
      _
    %286 = vsyncpa [#allocation5], 1
    %s287 = scalar_lea.sflag [#allocation5], 1
    %288 = vsyncpa %s287, 1
    %289 = vsyncpa [#allocation6], 1
    %s290 = scalar_lea.sflag [#allocation6], 1
    %291 = vsyncpa %s290, 1

</llo_original>
